<compile_context>
chip_gen: v6e
topology: v6e:2x2x1
jax: 0.10.0
libtpu: 0.0.40
codegen_flags: <defaults>
</compile_context>

<pallas_src>
import functools

import jax
import jax.numpy as jnp
from jax.experimental import pallas as pl
from jax.experimental.pallas import tpu as pltpu


# ----------------------------------------------------------------------------
# Kernels
# ----------------------------------------------------------------------------
def _bias_kernel(x_ref, b_ref, o_ref):
    # x_ref: (bn, G, tl)   b_ref: (1, tl)   o_ref: (bn, tl)
    x = x_ref[...]
    acc = x[:, 0, :]
    for g in range(1, x.shape[1]):          # G is tiny -> unrolled VPU adds
        acc = acc + x[:, g, :]
    o_ref[...] = acc + b_ref[...]           # (1, tl) broadcasts over bn sublanes


def _group_sum_kernel(x_ref, o_ref):
    # Same as above, module constructed with bias=False.
    x = x_ref[...]
    acc = x[:, 0, :]
    for g in range(1, x.shape[1]):
        acc = acc + x[:, g, :]
    o_ref[...] = acc


# ----------------------------------------------------------------------------
# Wrapper
# ----------------------------------------------------------------------------
def _pick_divisor(total, candidates):
    """Largest candidate that evenly divides `total`, else `total` (full extent)."""
    for c in candidates:
        if total % c == 0:
            return c
    return total


def bias_forward(x, in_channels, bias=None):
    """Pallas equivalent of Bias(in_channels, out_channels).forward.

    x:    (N, C, H, W) with C % in_channels == 0
    bias: None, or an array reshapeable to (C // in_channels,)
          (PyTorch stores it as (1, out_channels, 1, 1)).
    Returns (N, C // in_channels, H, W).
    """
    n, c, h, w = x.shape
    assert c % in_channels == 0, (c, in_channels)
    oc = c // in_channels
    hw = h * w
    ochw = oc * hw

    # Free contiguous reshape: channel index = g*oc + o  ->  (N, G, oc*h*w).
    x3 = x.reshape(n, in_channels, ochw)

    # Tile selection: largest divisors -> fewest grid steps, lane dim stays a
    # multiple of 128 (or the full extent), batch tile divisible by 8 or full.
    bn = _pick_divisor(n, (256, 128, 64, 32, 16, 8))
    tl = _pick_divisor(ochw, (16384, 8192, 4096, 2048, 1024, 512, 256, 128))
    grid = (n // bn, ochw // tl)

    in_specs = [pl.BlockSpec((bn, in_channels, tl), lambda b, j: (b, 0, j))]
    args = [x3]
    if bias is not None:
        # Lane index is o*hw + (h*w + w); expand bias once so each value
        # occupies its hw lanes (tiny, done a single time outside the kernel).
        b_row = (jnp.repeat(jnp.asarray(bias).reshape(oc), hw)
                 .reshape(1, ochw).astype(x.dtype))
        in_specs.append(pl.BlockSpec((1, tl), lambda b, j: (0, j)))
        args.append(b_row)
        kernel = _bias_kernel
    else:
        kernel = _group_sum_kernel

    out = pl.pallas_call(
        kernel,
        out_shape=jax.ShapeDtypeStruct((n, ochw), x.dtype),
        grid_spec=pltpu.PrefetchScalarGridSpec(
            num_scalar_prefetch=0,
            grid=grid,
            in_specs=in_specs,
            out_specs=pl.BlockSpec((bn, tl), lambda b, j: (b, j)),
        ),
        compiler_params=pltpu.CompilerParams(
            dimension_semantics=("parallel", "parallel")),
    )(*args)
    return out.reshape(n, oc, h, w)


# ----------------------------------------------------------------------------
# Pure-JAX reference with exact PyTorch semantics
# ----------------------------------------------------------------------------
def reference_bias(x, in_channels, bias=None):
    n, c, h, w = x.shape
    y = x.reshape(n, in_channels, c // in_channels, h, w).sum(axis=1)
    if bias is not None:
        y = y + jnp.asarray(bias).reshape(1, -1, 1, 1)
    return y


if __name__ == "__main__":
    key = jax.random.PRNGKey(0)
    kx, kb = jax.random.split(key)

    in_channels, out_channels = 2, 2                       # C = in*out = 4
    x = jax.random.normal(kx, (2, in_channels * out_channels, 16, 16),
                          jnp.float32)
    bias = 0.1 * jax.random.normal(kb, (1, out_channels, 1, 1), jnp.float32)

    fwd = jax.jit(bias_forward, static_argnums=1)

    # --- bias=True path (learnable bias exercised) ---
    out = jax.block_until_ready(fwd(x, in_channels, bias))
    ref = reference_bias(x, in_channels, bias)
    assert out.shape == (2, out_channels, 16, 16), out.shape
    assert jnp.allclose(out, ref, atol=1e-6, rtol=1e-6), (
        float(jnp.max(jnp.abs(out - ref))))

    # --- bias=False path (module default) ---
    out_nb = jax.block_until_ready(fwd(x, in_channels, None))
    ref_nb = reference_bias(x, in_channels, None)
    assert jnp.allclose(out_nb, ref_nb, atol=1e-6, rtol=1e-6), (
        float(jnp.max(jnp.abs(out_nb - ref_nb))))

    print("KERNEL_OK")
</pallas_src>

<mosaic_0001>
module attributes {stable_mosaic.version = 11 : i64} {
  func.func @_bias_kernel(%arg0: i32, %arg1: i32, %arg2: memref<2x2x512xf32, #tpu.memory_space<vmem>>, %arg3: memref<1x512xf32, #tpu.memory_space<vmem>>, %arg4: memref<2x512xf32, #tpu.memory_space<vmem>>) attributes {dimension_semantics = [#tpu.dimension_semantics<parallel>, #tpu.dimension_semantics<parallel>], iteration_bounds = array<i64: 1, 1>, scalar_prefetch = 0 : i64, scratch_operands = 0 : i64, tpu.core_type = #tpu.core_type<tc>, window_params = [{transform_indices = @transform_0, window_bounds = array<i64: 2, 2, 512>}, {transform_indices = @transform_1, window_bounds = array<i64: 1, 512>}, {transform_indices = @transform_2, window_bounds = array<i64: 2, 512>}]} {
    %c0 = arith.constant 0 : index
    %c0_0 = arith.constant 0 : index
    %c0_1 = arith.constant 0 : index
    %0 = vector.load %arg2[%c0, %c0_0, %c0_1] : memref<2x2x512xf32, #tpu.memory_space<vmem>>, vector<2x2x512xf32>
    %1 = vector.extract_strided_slice %0 {offsets = [0, 0, 0], sizes = [2, 1, 512], strides = [1, 1, 1]} : vector<2x2x512xf32> to vector<2x1x512xf32>
    %2 = vector.shape_cast %1 : vector<2x1x512xf32> to vector<2x512xf32>
    %3 = vector.extract_strided_slice %0 {offsets = [0, 1, 0], sizes = [2, 1, 512], strides = [1, 1, 1]} : vector<2x2x512xf32> to vector<2x1x512xf32>
    %4 = vector.shape_cast %3 : vector<2x1x512xf32> to vector<2x512xf32>
    %5 = arith.addf %2, %4 : vector<2x512xf32>
    %c0_2 = arith.constant 0 : index
    %c0_3 = arith.constant 0 : index
    %6 = vector.load %arg3[%c0_2, %c0_3] : memref<1x512xf32, #tpu.memory_space<vmem>>, vector<1x512xf32>
    %7 = vector.broadcast %6 : vector<1x512xf32> to vector<2x512xf32>
    %8 = arith.addf %5, %7 : vector<2x512xf32>
    %c0_4 = arith.constant 0 : index
    %c0_5 = arith.constant 0 : index
    %9 = vector.load %arg4[%c0_4, %c0_5] : memref<2x512xf32, #tpu.memory_space<vmem>>, vector<2x512xf32>
    tpu.vector_store %arg4[%c0_4, %c0_5], %8 {strides = array<i32>} : memref<2x512xf32, #tpu.memory_space<vmem>>, vector<2x512xf32>,
    return
  }
  func.func @transform_0(%arg0: i32, %arg1: i32) -> (i32, i32, i32) {
    %c0_i32 = arith.constant 0 : i32
    %c0_i32_0 = arith.constant 0 : i32
    return %arg0, %c0_i32, %arg1 : i32, i32, i32
  }
  func.func @transform_1(%arg0: i32, %arg1: i32) -> (i32, i32) {
    %c0_i32 = arith.constant 0 : i32
    %c0_i32_0 = arith.constant 0 : i32
    return %c0_i32, %arg1 : i32, i32
  }
  func.func @transform_2(%arg0: i32, %arg1: i32) -> (i32, i32) {
    %c0_i32 = arith.constant 0 : i32
    return %arg0, %arg1 : i32, i32
  }
}

</mosaic_0001>

<llo_original>
// kernel: bias_forward.1
$region0: #{bias_forward.1}
  #allocation0 [shape = 'u32[]', space=smem, size = 0x4, offset = 0x4, fixed_abs, tag = 'smem constant byte address 0x4 - core index']
  #allocation1 [shape = 'u32[144,128]{1,0:T(1,128)}', space=vmem, size = 0x12000, scoped, tag = 'internal scratch']
  %s0 = inlined_call_operand.vmem [shape: f32[2,2,512], index: 0, kind: input, shape index: {}]
  %s1 = inlined_call_operand.vmem [shape: f32[1,512], index: 1, kind: input, shape index: {}]
  %s2 = inlined_call_operand.vmem [shape: f32[2,512], index: 2, kind: output, shape index: {}]
  %s3 = sld [smem:[#allocation0]]
  $region18: #{bias_forward.1} parent=0
    _
  %s5 = ssub.s32 1, %s3
  %s6 = scalar_select 0, %s5, %s3
  // Predicated region
  $region2: #{bias_forward.1} parent=0 // pred_check
    _
  $region3: #{bias_forward.1} parent=0 // pred_check_branch
    %8 = sbr.rel (0) target = $region5
  $region4: #{bias_forward.1} parent=0 // pred_region
    _
  $region5: #{bias_forward.1} parent=0 // pred_fallthru
    _
  // Predicated region
  $region6: #{bias_forward.1} parent=0 // pred_check
    _
  $region7: #{bias_forward.1} parent=0 // pred_check_branch
    %10 = sbr.rel (0) target = $region9
  $region8: #{bias_forward.1} parent=0 // pred_region
    _
  $region9: #{bias_forward.1} parent=0 // pred_fallthru
    _
  %v11 = vld [vmem:[%s0] sm:$0xff]
  %v12 = vld [vmem:[%s0 + $0x8] sm:$0xff]
  %v15 = vrot.slane %v11, 7
  %v16 = vrot.slane %v15, 2
  %v17 = vrot.slane %v12, 7
  %v18 = vrot.slane %v17, 2
  %v21 = vadd.f32 %v11, %v16
  %v22 = vadd.f32 %v12, %v18
  %v23 = vld [vmem:[%s1] sm:$0xf]
  %v25 = vlaneseq
  %v26 = vshrl.u32 %v25, 7
  %v27 = vsub.s32 0, %v26
  %v28 = vrot.slane %v23, %v27
  %v29 = vlaneseq
  %v30 = vshrl.u32 %v29, 7
  %v31 = vsub.s32 1, %v30
  %v32 = vrot.slane %v23, %v31
  %v33 = vlaneseq
  %v34 = vshrl.u32 %v33, 7
  %v35 = vsub.s32 2, %v34
  %v36 = vrot.slane %v23, %v35
  %v37 = vlaneseq
  %v38 = vshrl.u32 %v37, 7
  %v39 = vsub.s32 3, %v38
  %v40 = vrot.slane %v23, %v39
  %v41 = vcombine.low %v28, %v32
  %v42 = vcombine.low %v36, %v40
  %v44 = vunpack.c.l.s4 1983009808
  %v45 = vunpack.c.0.s8 %v44
  %v46 = vlaneseq
  %v47 = vshrl.u32 %v46, 7
  %v48 = vsub.s32 %v45, %v47
  %v49 = vrot.slane %v41, %v48
  %v51 = vunpack.c.l.s4 1983009808
  %v52 = vunpack.c.0.s8 %v51
  %v53 = vlaneseq
  %v54 = vshrl.u32 %v53, 7
  %v55 = vsub.s32 %v52, %v54
  %v56 = vrot.slane %v42, %v55
  %v57 = vcombine.low %v49, %v56
  %v58 = vrot.slane %v57, 1
  %v61 = vadd.f32 %v21, %v57
  %v62 = vadd.f32 %v22, %v58
  %vm65 = vcmask 1044484
  %v66 = vsel %vm65, %v61, %v61
  %vm67 = vcmask 1046534
  %v68 = vsel %vm67, %v61, %v66
  %v69 = vrot.slane %v62, 7
  %vm70 = vcmask 1041409
  %v71 = vsel %vm70, %v69, %v68
  %vm72 = vcmask 1043459
  %v73 = vsel %vm72, %v69, %v71
  %vm74 = vcmask 1045509
  %v75 = vsel %vm74, %v69, %v73
  %vm76 = vcmask 1047559
  %v77 = vsel %vm76, %v69, %v75
  %79 = vst [vmem:[%s2] sm:$0xff] %v77
  // Predicated region
  $region10: #{bias_forward.1} parent=0 // pred_check
    _
  $region11: #{bias_forward.1} parent=0 // pred_check_branch
    %81 = sbr.rel (0) target = $region13
  $region12: #{bias_forward.1} parent=0 // pred_region
    _
  $region13: #{bias_forward.1} parent=0 // pred_fallthru
    _
  // Predicated region
  $region14: #{bias_forward.1} parent=0 // pred_check
    _
  $region15: #{bias_forward.1} parent=0 // pred_check_branch
    %83 = sbr.rel (0) target = $region17
  $region16: #{bias_forward.1} parent=0 // pred_region
    _
  $region17: #{bias_forward.1} parent=0 // pred_fallthru
    _

</llo_original>
